<compile_context>
chip_gen: v6e
topology: v6e:2x2x1
jax: 0.10.0
libtpu: 0.0.40
codegen_flags: <defaults>
</compile_context>

<pallas_src>
import functools

import jax
import jax.numpy as jnp
from jax import lax
from jax.experimental import pallas as pl
from jax.experimental.pallas import tpu as pltpu

EPS = 1e-5
SLOPE = 0.02


# --------------------------------------------------------------------------- #
# Kernel helpers (all operate on the (N*C, H*W) lane-dense view)
# --------------------------------------------------------------------------- #
def _bn_lrelu(x2, p_scaled, gamma_rows, beta_rows, *, leaky):
    """Training-mode BatchNorm2d (+ optional LeakyReLU) on the (NC, HW) view.

    Lane-reduce first, then aggregate same-channel rows with one tiny
    (NC,NC) x (NC,2) matmul.  p_scaled[i,j] = [chan(i)==chan(j)] / (N*H*W).
    """
    s1 = jnp.sum(x2, axis=1, keepdims=True)                # (NC, 1)  sum x
    s2 = jnp.sum(x2 * x2, axis=1, keepdims=True)           # (NC, 1)  sum x^2
    stats = jnp.dot(p_scaled, jnp.concatenate([s1, s2], axis=1),
                    preferred_element_type=jnp.float32)     # (NC, 2)
    mean = stats[:, 0:1]
    var = jnp.maximum(stats[:, 1:2] - mean * mean, 0.0)     # biased, clamped
    scale = gamma_rows * lax.rsqrt(var + EPS)
    y = x2 * scale + (beta_rows - mean * scale)
    if leaky:
        y = jnp.where(y > 0, y, SLOPE * y)
    return y


def _conv3x3(h, a_bf16, mask_l, mask_r, *, width):
    """3x3 SAME conv (== ConvTranspose2d(3,1,pad=1)) as one im2col matmul.

    h:       (NC, HW) f32 activations, lane = h*W + w
    a_bf16:  (NC, 9*NC) packed block-diagonal weights (bf16, tap-major)
    mask_l:  (NC, HW) bool, False where w == 0     (needed by kw == 0 taps)
    mask_r:  (NC, HW) bool, False where w == W-1   (needed by kw == 2 taps)
    A single zero-margined bf16 slab supplies all 9 taps as static lane
    slices; the margin zero-pads the top/bottom rows for free and the two
    lane masks fix the left/right row wrap-around.
    """
    rows, L = h.shape
    pad = width + 1
    hb = h.astype(jnp.bfloat16)                              # cast once
    zpad = jnp.zeros((rows, pad), jnp.bfloat16)
    slab = jnp.concatenate([zpad, hb, zpad], axis=1)         # (NC, HW+2W+2)
    zero = jnp.zeros((), jnp.bfloat16)

    parts = []
    for kh in range(3):
        for kw in range(3):
            s = (kh - 1) * width + (kw - 1)                  # static lane shift
            part = slab[:, pad + s: pad + s + L]
            if kw == 0:
                part = jnp.where(mask_l, part, zero)
            elif kw == 2:
                part = jnp.where(mask_r, part, zero)
            parts.append(part)
    xcat = jnp.concatenate(parts, axis=0)                    # (9*NC, HW) bf16
    return jnp.dot(a_bf16, xcat, preferred_element_type=jnp.float32)


def resblock_kernel(x_ref, a1_ref, a2_ref, vec_ref, out_ref, *, width):
    x2 = x_ref[...]                       # (NC, HW) f32
    nc, hw = x2.shape

    vec = vec_ref[...]                    # (NC, 6 + NC) f32, one packed tile
    g1, be1 = vec[:, 0:1], vec[:, 1:2]
    g2, be2 = vec[:, 2:3], vec[:, 3:4]
    g3, be3 = vec[:, 4:5], vec[:, 5:6]
    p = vec[:, 6:6 + nc]                  # channel-averaging matrix / (N*H*W)

    # Horizontal-tap validity masks, built in-kernel (no HBM traffic).
    col = lax.broadcasted_iota(jnp.int32, (nc, hw), 1) % width
    mask_l = col != 0                     # keep where w != 0   (kw == 0 taps)
    mask_r = col != (width - 1)           # keep where w != W-1 (kw == 2 taps)

    h = _bn_lrelu(x2, p, g1, be1, leaky=True)
    h = _conv3x3(h, a1_ref[...], mask_l, mask_r, width=width)
    h = _bn_lrelu(h, p, g2, be2, leaky=True)
    h = _conv3x3(h, a2_ref[...], mask_l, mask_r, width=width)
    h = _bn_lrelu(h, p, g3, be3, leaky=False)

    out_ref[...] = h + x2                 # identity bypass; dense 256-lane store


# --------------------------------------------------------------------------- #
# Parameter packing (pure-JAX glue, tiny arrays, runs at trace time)
# --------------------------------------------------------------------------- #
def _pack_for_kernel(params, N, C, H, W):
    wc1, _b1, wc2, _b2, g1, be1, g2, be2, g3, be3 = params
    NC = N * C

    def conv_mat(wc9):
        # A[n*C + co, t*NC + n*C + ci] = wc9[t, ci, co]
        eye_n = jnp.eye(N, dtype=jnp.float32)
        blocks = [jnp.kron(eye_n, wc9[t].T) for t in range(9)]
        # TODO(synk): for large N, grid over batch instead of this O(N^2)
        #   block-diagonal weight (most of it multiplies zeros).
        return jnp.concatenate(blocks, axis=1).astype(jnp.bfloat16)  # (NC, 9NC)

    def rows(v):  # (C,) -> (NC, 1), row n*C + c -> v[c]
        return jnp.tile(v.astype(jnp.float32), N).reshape(NC, 1)

    # Channel-averaging matrix, pre-scaled by 1/(N*H*W).
    idx = jnp.arange(NC)
    p = (idx[:, None] % C == idx[None, :] % C).astype(jnp.float32) / (N * H * W)

    # NOTE: conv biases b1/b2 are NOT shipped — a per-channel constant added
    # right before a batch-stats BatchNorm cancels exactly in (x - mean).
    vec = jnp.concatenate([rows(g1), rows(be1), rows(g2), rows(be2),
                           rows(g3), rows(be3), p], axis=1)   # (NC, 6 + NC)
    return conv_mat(wc1), conv_mat(wc2), vec


def resblock_transpose(x_nchw, params):
    N, C, H, W = x_nchw.shape
    NC, HW = N * C, H * W
    # Layout assumptions for the lane-dense view (hold for the toy shape).
    assert NC % 8 == 0 and HW % 128 == 0, (
        f"resblock_transpose expects N*C % 8 == 0 and H*W % 128 == 0 "
        f"(got NC={NC}, HW={HW}); other shapes pad the (NC, HW) view.")

    # Free view change: NCHW -> (N*C, H*W).  No transpose, no extra HBM pass.
    x2 = x_nchw.astype(jnp.float32).reshape(NC, HW)
    a1, a2, vec = _pack_for_kernel(params, N, C, H, W)

    vmem = pl.BlockSpec(memory_space=pltpu.MemorySpace.VMEM)

    # Generation-aware scoped-VMEM budget: generous for the fully-resident toy
    # working set, but never more than 75% of physical VMEM (v7x has 64 MiB).
    plane = NC * HW * 4
    want = max(8 * 1024 * 1024, 64 * plane)
    try:
        cap = int(pltpu.get_tpu_info().vmem_capacity_bytes)
    except Exception:
        cap = 64 * 1024 * 1024
    vmem_limit = int(min(want, (cap * 3) // 4))

    out2 = pl.pallas_call(
        functools.partial(resblock_kernel, width=W),
        out_shape=jax.ShapeDtypeStruct((NC, HW), jnp.float32),
        in_specs=[vmem] * 4,
        out_specs=vmem,
        compiler_params=pltpu.CompilerParams(vmem_limit_bytes=vmem_limit),
    )(x2, a1, a2, vec)
    return out2.reshape(N, C, H, W)


# --------------------------------------------------------------------------- #
# Module parameters (PyTorch-equivalent init) and pure-JAX reference
# --------------------------------------------------------------------------- #
def init_params(key, in_ch, out_ch):
    # Identity bypass (model(x) + x) requires matching channel counts.
    assert in_ch == out_ch, "ResBlockTranspose identity bypass needs in_ch == out_ch"
    k1, k2, k3, k4 = jax.random.split(key, 4)

    def xavier_pt(k, cin, cout):
        # PyTorch ConvTranspose2d weight shape: (cin, cout, 3, 3)
        fan_in, fan_out = cout * 9, cin * 9
        bound = (6.0 / (fan_in + fan_out)) ** 0.5
        return jax.random.uniform(k, (cin, cout, 3, 3), jnp.float32, -bound, bound)

    def to_conv(w_pt):
        # conv_transpose(stride=1, pad=1) == SAME conv with flipped kernel and
        # swapped in/out channel axes -> (kh, kw, cin, cout), flattened taps.
        w = jnp.flip(w_pt, axis=(2, 3))
        w = jnp.transpose(w, (2, 3, 0, 1))
        return w.reshape(9, w.shape[2], w.shape[3])

    wc1 = to_conv(xavier_pt(k1, in_ch, out_ch))
    wc2 = to_conv(xavier_pt(k2, out_ch, out_ch))
    bbound = 1.0 / (out_ch * 9) ** 0.5
    b1 = jax.random.uniform(k3, (out_ch,), jnp.float32, -bbound, bbound)
    b2 = jax.random.uniform(k4, (out_ch,), jnp.float32, -bbound, bbound)
    ones = lambda c: jnp.ones((c,), jnp.float32)
    zeros = lambda c: jnp.zeros((c,), jnp.float32)
    return (wc1, b1, wc2, b2,
            ones(in_ch), zeros(in_ch),      # BN1 gamma/beta
            ones(out_ch), zeros(out_ch),    # BN2
            ones(out_ch), zeros(out_ch))    # BN3


def reference(x_nchw, params):
    wc1, b1, wc2, b2, g1, be1, g2, be2, g3, be3 = params
    x = x_nchw.astype(jnp.float32)

    def bn(h, g, b):
        mean = h.mean(axis=(0, 2, 3), keepdims=True)
        var = ((h - mean) ** 2).mean(axis=(0, 2, 3), keepdims=True)
        return ((h - mean) / jnp.sqrt(var + EPS) * g.reshape(1, -1, 1, 1)
                + b.reshape(1, -1, 1, 1))

    def conv(h, wc9, b):
        w = wc9.reshape(3, 3, h.shape[1], -1)     # HWIO
        y = lax.conv_general_dilated(h, w, (1, 1), "SAME",
                                     dimension_numbers=("NCHW", "HWIO", "NCHW"))
        return y + b.reshape(1, -1, 1, 1)

    def lrelu(h):
        return jnp.where(h > 0, h, SLOPE * h)

    h = lrelu(bn(x, g1, be1))
    h = conv(h, wc1, b1)
    h = lrelu(bn(h, g2, be2))
    h = conv(h, wc2, b2)
    h = bn(h, g3, be3)
    return h + x


if __name__ == "__main__":
    key = jax.random.PRNGKey(0)
    kx, kp = jax.random.split(key)
    N, C, H, W = 2, 4, 16, 16
    x = jax.random.normal(kx, (N, C, H, W), jnp.float32)
    params = init_params(kp, C, C)

    out = jax.jit(resblock_transpose)(x, params)
    out = jax.block_until_ready(out)

    ref = reference(x, params)
    assert out.shape == (N, C, H, W)
    # bf16 MXU operands bound the error well under 3e-2 (reference conv biases
    # cancel analytically inside the following batch-stats BN).
    if not jnp.allclose(out, ref, atol=3e-2, rtol=3e-2):
        raise AssertionError(
            f"mismatch vs reference: max abs err {float(jnp.abs(out - ref).max())}")
    print("KERNEL_OK")
</pallas_src>

<mosaic_0001>
module attributes {stable_mosaic.version = 11 : i64} {
  func.func @resblock_kernel(%arg0: memref<8x256xf32, #tpu.memory_space<vmem>>, %arg1: memref<8x72xbf16, #tpu.memory_space<vmem>>, %arg2: memref<8x72xbf16, #tpu.memory_space<vmem>>, %arg3: memref<8x14xf32, #tpu.memory_space<vmem>>, %arg4: memref<8x256xf32, #tpu.memory_space<vmem>>) attributes {dimension_semantics = [], scalar_prefetch = 0 : i64, scratch_operands = 0 : i64, tpu.core_type = #tpu.core_type<tc>} {
    %c0 = arith.constant 0 : index
    %c0_0 = arith.constant 0 : index
    %0 = vector.load %arg0[%c0, %c0_0] : memref<8x256xf32, #tpu.memory_space<vmem>>, vector<8x256xf32>
    %c0_1 = arith.constant 0 : index
    %c0_2 = arith.constant 0 : index
    %1 = vector.load %arg3[%c0_1, %c0_2] : memref<8x14xf32, #tpu.memory_space<vmem>>, vector<8x14xf32>
    %2 = vector.extract_strided_slice %1 {offsets = [0, 0], sizes = [8, 1], strides = [1, 1]} : vector<8x14xf32> to vector<8x1xf32>
    %3 = vector.extract_strided_slice %1 {offsets = [0, 1], sizes = [8, 1], strides = [1, 1]} : vector<8x14xf32> to vector<8x1xf32>
    %4 = vector.extract_strided_slice %1 {offsets = [0, 2], sizes = [8, 1], strides = [1, 1]} : vector<8x14xf32> to vector<8x1xf32>
    %5 = vector.extract_strided_slice %1 {offsets = [0, 3], sizes = [8, 1], strides = [1, 1]} : vector<8x14xf32> to vector<8x1xf32>
    %6 = vector.extract_strided_slice %1 {offsets = [0, 4], sizes = [8, 1], strides = [1, 1]} : vector<8x14xf32> to vector<8x1xf32>
    %7 = vector.extract_strided_slice %1 {offsets = [0, 5], sizes = [8, 1], strides = [1, 1]} : vector<8x14xf32> to vector<8x1xf32>
    %8 = vector.extract_strided_slice %1 {offsets = [0, 6], sizes = [8, 8], strides = [1, 1]} : vector<8x14xf32> to vector<8x8xf32>
    %9 = tpu.iota {dimensions = array<i32: 1>} : vector<8x256xi32>
    %c16_i32 = arith.constant 16 : i32
    %c0_i32 = arith.constant 0 : i32
    %10 = arith.cmpi eq, %c16_i32, %c0_i32 : i32
    %c1_i32 = arith.constant 1 : i32
    %11 = arith.select %10, %c1_i32, %c16_i32 : i32
    %12 = vector.broadcast %11 : i32 to vector<8x256xi32>
    %13 = arith.remsi %9, %12 : vector<8x256xi32>
    %c0_i32_3 = arith.constant 0 : i32
    %14 = vector.broadcast %c0_i32_3 : i32 to vector<8x256xi32>
    %15 = arith.cmpi ne, %13, %14 : vector<8x256xi32>
    %c0_i32_4 = arith.constant 0 : i32
    %16 = vector.broadcast %c0_i32_4 : i32 to vector<8x256xi32>
    %17 = arith.cmpi slt, %13, %16 : vector<8x256xi32>
    %c0_i32_5 = arith.constant 0 : i32
    %18 = arith.cmpi slt, %11, %c0_i32_5 : i32
    %19 = vector.broadcast %18 : i1 to vector<8x256xi1>
    %20 = vector.broadcast %19 : vector<8x256xi1> to vector<8x256xi1>
    %21 = arith.xori %17, %20 : vector<8x256xi1>
    %22 = arith.andi %21, %15 : vector<8x256xi1>
    %23 = vector.broadcast %11 : i32 to vector<8x256xi32>
    %24 = arith.addi %13, %23 : vector<8x256xi32>
    %25 = arith.select %22, %24, %13 : vector<8x256xi1>, vector<8x256xi32>
    %c0_i32_6 = arith.constant 0 : i32
    %26 = vector.broadcast %c0_i32_6 : i32 to vector<8x256xi32>
    %27 = arith.cmpi ne, %25, %26 : vector<8x256xi32>
    %c15_i32 = arith.constant 15 : i32
    %28 = vector.broadcast %c15_i32 : i32 to vector<8x256xi32>
    %29 = arith.cmpi ne, %25, %28 : vector<8x256xi32>
    %cst = arith.constant dense<0.000000e+00> : vector<8xf32>
    %30 = vector.multi_reduction <add>, %0, %cst [1] : vector<8x256xf32> to vector<8xf32>
    %31 = vector.shape_cast %30 : vector<8xf32> to vector<8x1xf32>
    %32 = arith.mulf %0, %0 : vector<8x256xf32>
    %cst_7 = arith.constant dense<0.000000e+00> : vector<8xf32>
    %33 = vector.multi_reduction <add>, %32, %cst_7 [1] : vector<8x256xf32> to vector<8xf32>
    %34 = vector.shape_cast %33 : vector<8xf32> to vector<8x1xf32>
    %35 = tpu.concatenate %31, %34 in 1 : vector<8x1xf32>, vector<8x1xf32> -> vector<8x2xf32>
    %cst_8 = arith.constant dense<0.000000e+00> : vector<8x2xf32>
    %36 = tpu.matmul %8, %35, %cst_8 {dimension_numbers = #tpu.dot_dimension_numbers<[1], [0], [0], [1], [0, 0, 1, 1], [], []>} : vector<8x8xf32>, vector<8x2xf32>, vector<8x2xf32> -> vector<8x2xf32>
    %37 = vector.extract_strided_slice %36 {offsets = [0, 0], sizes = [8, 1], strides = [1, 1]} : vector<8x2xf32> to vector<8x1xf32>
    %38 = vector.extract_strided_slice %36 {offsets = [0, 1], sizes = [8, 1], strides = [1, 1]} : vector<8x2xf32> to vector<8x1xf32>
    %39 = arith.mulf %37, %37 : vector<8x1xf32>
    %40 = arith.subf %38, %39 : vector<8x1xf32>
    %cst_9 = arith.constant 0.000000e+00 : f32
    %41 = vector.broadcast %cst_9 : f32 to vector<8x1xf32>
    %42 = arith.maximumf %40, %41 : vector<8x1xf32>
    %cst_10 = arith.constant 9.99999974E-6 : f32
    %43 = vector.broadcast %cst_10 : f32 to vector<8x1xf32>
    %44 = arith.addf %42, %43 : vector<8x1xf32>
    %45 = math.rsqrt %44 : vector<8x1xf32>
    %46 = arith.mulf %2, %45 : vector<8x1xf32>
    %47 = vector.broadcast %46 : vector<8x1xf32> to vector<8x256xf32>
    %48 = arith.mulf %0, %47 : vector<8x256xf32>
    %49 = arith.mulf %37, %46 : vector<8x1xf32>
    %50 = arith.subf %3, %49 : vector<8x1xf32>
    %51 = vector.broadcast %50 : vector<8x1xf32> to vector<8x256xf32>
    %52 = arith.addf %48, %51 : vector<8x256xf32>
    %cst_11 = arith.constant 0.000000e+00 : f32
    %53 = vector.broadcast %cst_11 : f32 to vector<8x256xf32>
    %54 = arith.cmpf ogt, %52, %53 : vector<8x256xf32>
    %cst_12 = arith.constant 2.000000e-02 : f32
    %55 = vector.broadcast %cst_12 : f32 to vector<8x256xf32>
    %56 = arith.mulf %55, %52 : vector<8x256xf32>
    %57 = arith.select %54, %52, %56 : vector<8x256xi1>, vector<8x256xf32>
    %c0_13 = arith.constant 0 : index
    %c0_14 = arith.constant 0 : index
    %58 = vector.load %arg1[%c0_13, %c0_14] : memref<8x72xbf16, #tpu.memory_space<vmem>>, vector<8x72xbf16>
    %59 = arith.truncf %57 : vector<8x256xf32> to vector<8x256xbf16>
    %cst_15 = arith.constant 0.000000e+00 : bf16
    %60 = vector.broadcast %cst_15 : bf16 to vector<8x17xbf16>
    %61 = tpu.concatenate %60, %59, %60 in 1 : vector<8x17xbf16>, vector<8x256xbf16>, vector<8x17xbf16> -> vector<8x290xbf16>
    %62 = vector.extract_strided_slice %61 {offsets = [0, 0], sizes = [8, 256], strides = [1, 1]} : vector<8x290xbf16> to vector<8x256xbf16>
    %cst_16 = arith.constant 0.000000e+00 : bf16
    %63 = vector.broadcast %cst_16 : bf16 to vector<8x256xbf16>
    %64 = arith.select %27, %62, %63 : vector<8x256xi1>, vector<8x256xbf16>
    %65 = vector.extract_strided_slice %61 {offsets = [0, 1], sizes = [8, 256], strides = [1, 1]} : vector<8x290xbf16> to vector<8x256xbf16>
    %66 = vector.extract_strided_slice %61 {offsets = [0, 2], sizes = [8, 256], strides = [1, 1]} : vector<8x290xbf16> to vector<8x256xbf16>
    %cst_17 = arith.constant 0.000000e+00 : bf16
    %67 = vector.broadcast %cst_17 : bf16 to vector<8x256xbf16>
    %68 = arith.select %29, %66, %67 : vector<8x256xi1>, vector<8x256xbf16>
    %69 = vector.extract_strided_slice %61 {offsets = [0, 16], sizes = [8, 256], strides = [1, 1]} : vector<8x290xbf16> to vector<8x256xbf16>
    %cst_18 = arith.constant 0.000000e+00 : bf16
    %70 = vector.broadcast %cst_18 : bf16 to vector<8x256xbf16>
    %71 = arith.select %27, %69, %70 : vector<8x256xi1>, vector<8x256xbf16>
    %72 = vector.extract_strided_slice %61 {offsets = [0, 17], sizes = [8, 256], strides = [1, 1]} : vector<8x290xbf16> to vector<8x256xbf16>
    %73 = vector.extract_strided_slice %61 {offsets = [0, 18], sizes = [8, 256], strides = [1, 1]} : vector<8x290xbf16> to vector<8x256xbf16>
    %cst_19 = arith.constant 0.000000e+00 : bf16
    %74 = vector.broadcast %cst_19 : bf16 to vector<8x256xbf16>
    %75 = arith.select %29, %73, %74 : vector<8x256xi1>, vector<8x256xbf16>
    %76 = vector.extract_strided_slice %61 {offsets = [0, 32], sizes = [8, 256], strides = [1, 1]} : vector<8x290xbf16> to vector<8x256xbf16>
    %cst_20 = arith.constant 0.000000e+00 : bf16
    %77 = vector.broadcast %cst_20 : bf16 to vector<8x256xbf16>
    %78 = arith.select %27, %76, %77 : vector<8x256xi1>, vector<8x256xbf16>
    %79 = vector.extract_strided_slice %61 {offsets = [0, 33], sizes = [8, 256], strides = [1, 1]} : vector<8x290xbf16> to vector<8x256xbf16>
    %80 = vector.extract_strided_slice %61 {offsets = [0, 34], sizes = [8, 256], strides = [1, 1]} : vector<8x290xbf16> to vector<8x256xbf16>
    %cst_21 = arith.constant 0.000000e+00 : bf16
    %81 = vector.broadcast %cst_21 : bf16 to vector<8x256xbf16>
    %82 = arith.select %29, %80, %81 : vector<8x256xi1>, vector<8x256xbf16>
    %83 = tpu.concatenate %64, %65, %68, %71, %72, %75, %78, %79, %82 in 0 : vector<8x256xbf16>, vector<8x256xbf16>, vector<8x256xbf16>, vector<8x256xbf16>, vector<8x256xbf16>, vector<8x256xbf16>, vector<8x256xbf16>, vector<8x256xbf16>, vector<8x256xbf16> -> vector<72x256xbf16>
    %cst_22 = arith.constant dense<0.000000e+00> : vector<8x256xf32>
    %84 = tpu.matmul %58, %83, %cst_22 {dimension_numbers = #tpu.dot_dimension_numbers<[1], [0], [0], [1], [0, 0, 1, 1], [], []>} : vector<8x72xbf16>, vector<72x256xbf16>, vector<8x256xf32> -> vector<8x256xf32>
    %cst_23 = arith.constant dense<0.000000e+00> : vector<8xf32>
    %85 = vector.multi_reduction <add>, %84, %cst_23 [1] : vector<8x256xf32> to vector<8xf32>
    %86 = vector.shape_cast %85 : vector<8xf32> to vector<8x1xf32>
    %87 = arith.mulf %84, %84 : vector<8x256xf32>
    %cst_24 = arith.constant dense<0.000000e+00> : vector<8xf32>
    %88 = vector.multi_reduction <add>, %87, %cst_24 [1] : vector<8x256xf32> to vector<8xf32>
    %89 = vector.shape_cast %88 : vector<8xf32> to vector<8x1xf32>
    %90 = tpu.concatenate %86, %89 in 1 : vector<8x1xf32>, vector<8x1xf32> -> vector<8x2xf32>
    %cst_25 = arith.constant dense<0.000000e+00> : vector<8x2xf32>
    %91 = tpu.matmul %8, %90, %cst_25 {dimension_numbers = #tpu.dot_dimension_numbers<[1], [0], [0], [1], [0, 0, 1, 1], [], []>} : vector<8x8xf32>, vector<8x2xf32>, vector<8x2xf32> -> vector<8x2xf32>
    %92 = vector.extract_strided_slice %91 {offsets = [0, 0], sizes = [8, 1], strides = [1, 1]} : vector<8x2xf32> to vector<8x1xf32>
    %93 = vector.extract_strided_slice %91 {offsets = [0, 1], sizes = [8, 1], strides = [1, 1]} : vector<8x2xf32> to vector<8x1xf32>
    %94 = arith.mulf %92, %92 : vector<8x1xf32>
    %95 = arith.subf %93, %94 : vector<8x1xf32>
    %cst_26 = arith.constant 0.000000e+00 : f32
    %96 = vector.broadcast %cst_26 : f32 to vector<8x1xf32>
    %97 = arith.maximumf %95, %96 : vector<8x1xf32>
    %cst_27 = arith.constant 9.99999974E-6 : f32
    %98 = vector.broadcast %cst_27 : f32 to vector<8x1xf32>
    %99 = arith.addf %97, %98 : vector<8x1xf32>
    %100 = math.rsqrt %99 : vector<8x1xf32>
    %101 = arith.mulf %4, %100 : vector<8x1xf32>
    %102 = vector.broadcast %101 : vector<8x1xf32> to vector<8x256xf32>
    %103 = arith.mulf %84, %102 : vector<8x256xf32>
    %104 = arith.mulf %92, %101 : vector<8x1xf32>
    %105 = arith.subf %5, %104 : vector<8x1xf32>
    %106 = vector.broadcast %105 : vector<8x1xf32> to vector<8x256xf32>
    %107 = arith.addf %103, %106 : vector<8x256xf32>
    %cst_28 = arith.constant 0.000000e+00 : f32
    %108 = vector.broadcast %cst_28 : f32 to vector<8x256xf32>
    %109 = arith.cmpf ogt, %107, %108 : vector<8x256xf32>
    %cst_29 = arith.constant 2.000000e-02 : f32
    %110 = vector.broadcast %cst_29 : f32 to vector<8x256xf32>
    %111 = arith.mulf %110, %107 : vector<8x256xf32>
    %112 = arith.select %109, %107, %111 : vector<8x256xi1>, vector<8x256xf32>
    %c0_30 = arith.constant 0 : index
    %c0_31 = arith.constant 0 : index
    %113 = vector.load %arg2[%c0_30, %c0_31] : memref<8x72xbf16, #tpu.memory_space<vmem>>, vector<8x72xbf16>
    %114 = arith.truncf %112 : vector<8x256xf32> to vector<8x256xbf16>
    %cst_32 = arith.constant 0.000000e+00 : bf16
    %115 = vector.broadcast %cst_32 : bf16 to vector<8x17xbf16>
    %116 = tpu.concatenate %115, %114, %115 in 1 : vector<8x17xbf16>, vector<8x256xbf16>, vector<8x17xbf16> -> vector<8x290xbf16>
    %117 = vector.extract_strided_slice %116 {offsets = [0, 0], sizes = [8, 256], strides = [1, 1]} : vector<8x290xbf16> to vector<8x256xbf16>
    %cst_33 = arith.constant 0.000000e+00 : bf16
    %118 = vector.broadcast %cst_33 : bf16 to vector<8x256xbf16>
    %119 = arith.select %27, %117, %118 : vector<8x256xi1>, vector<8x256xbf16>
    %120 = vector.extract_strided_slice %116 {offsets = [0, 1], sizes = [8, 256], strides = [1, 1]} : vector<8x290xbf16> to vector<8x256xbf16>
    %121 = vector.extract_strided_slice %116 {offsets = [0, 2], sizes = [8, 256], strides = [1, 1]} : vector<8x290xbf16> to vector<8x256xbf16>
    %cst_34 = arith.constant 0.000000e+00 : bf16
    %122 = vector.broadcast %cst_34 : bf16 to vector<8x256xbf16>
    %123 = arith.select %29, %121, %122 : vector<8x256xi1>, vector<8x256xbf16>
    %124 = vector.extract_strided_slice %116 {offsets = [0, 16], sizes = [8, 256], strides = [1, 1]} : vector<8x290xbf16> to vector<8x256xbf16>
    %cst_35 = arith.constant 0.000000e+00 : bf16
    %125 = vector.broadcast %cst_35 : bf16 to vector<8x256xbf16>
    %126 = arith.select %27, %124, %125 : vector<8x256xi1>, vector<8x256xbf16>
    %127 = vector.extract_strided_slice %116 {offsets = [0, 17], sizes = [8, 256], strides = [1, 1]} : vector<8x290xbf16> to vector<8x256xbf16>
    %128 = vector.extract_strided_slice %116 {offsets = [0, 18], sizes = [8, 256], strides = [1, 1]} : vector<8x290xbf16> to vector<8x256xbf16>
    %cst_36 = arith.constant 0.000000e+00 : bf16
    %129 = vector.broadcast %cst_36 : bf16 to vector<8x256xbf16>
    %130 = arith.select %29, %128, %129 : vector<8x256xi1>, vector<8x256xbf16>
    %131 = vector.extract_strided_slice %116 {offsets = [0, 32], sizes = [8, 256], strides = [1, 1]} : vector<8x290xbf16> to vector<8x256xbf16>
    %cst_37 = arith.constant 0.000000e+00 : bf16
    %132 = vector.broadcast %cst_37 : bf16 to vector<8x256xbf16>
    %133 = arith.select %27, %131, %132 : vector<8x256xi1>, vector<8x256xbf16>
    %134 = vector.extract_strided_slice %116 {offsets = [0, 33], sizes = [8, 256], strides = [1, 1]} : vector<8x290xbf16> to vector<8x256xbf16>
    %135 = vector.extract_strided_slice %116 {offsets = [0, 34], sizes = [8, 256], strides = [1, 1]} : vector<8x290xbf16> to vector<8x256xbf16>
    %cst_38 = arith.constant 0.000000e+00 : bf16
    %136 = vector.broadcast %cst_38 : bf16 to vector<8x256xbf16>
    %137 = arith.select %29, %135, %136 : vector<8x256xi1>, vector<8x256xbf16>
    %138 = tpu.concatenate %119, %120, %123, %126, %127, %130, %133, %134, %137 in 0 : vector<8x256xbf16>, vector<8x256xbf16>, vector<8x256xbf16>, vector<8x256xbf16>, vector<8x256xbf16>, vector<8x256xbf16>, vector<8x256xbf16>, vector<8x256xbf16>, vector<8x256xbf16> -> vector<72x256xbf16>
    %cst_39 = arith.constant dense<0.000000e+00> : vector<8x256xf32>
    %139 = tpu.matmul %113, %138, %cst_39 {dimension_numbers = #tpu.dot_dimension_numbers<[1], [0], [0], [1], [0, 0, 1, 1], [], []>} : vector<8x72xbf16>, vector<72x256xbf16>, vector<8x256xf32> -> vector<8x256xf32>
    %cst_40 = arith.constant dense<0.000000e+00> : vector<8xf32>
    %140 = vector.multi_reduction <add>, %139, %cst_40 [1] : vector<8x256xf32> to vector<8xf32>
    %141 = vector.shape_cast %140 : vector<8xf32> to vector<8x1xf32>
    %142 = arith.mulf %139, %139 : vector<8x256xf32>
    %cst_41 = arith.constant dense<0.000000e+00> : vector<8xf32>
    %143 = vector.multi_reduction <add>, %142, %cst_41 [1] : vector<8x256xf32> to vector<8xf32>
    %144 = vector.shape_cast %143 : vector<8xf32> to vector<8x1xf32>
    %145 = tpu.concatenate %141, %144 in 1 : vector<8x1xf32>, vector<8x1xf32> -> vector<8x2xf32>
    %cst_42 = arith.constant dense<0.000000e+00> : vector<8x2xf32>
    %146 = tpu.matmul %8, %145, %cst_42 {dimension_numbers = #tpu.dot_dimension_numbers<[1], [0], [0], [1], [0, 0, 1, 1], [], []>} : vector<8x8xf32>, vector<8x2xf32>, vector<8x2xf32> -> vector<8x2xf32>
    %147 = vector.extract_strided_slice %146 {offsets = [0, 0], sizes = [8, 1], strides = [1, 1]} : vector<8x2xf32> to vector<8x1xf32>
    %148 = vector.extract_strided_slice %146 {offsets = [0, 1], sizes = [8, 1], strides = [1, 1]} : vector<8x2xf32> to vector<8x1xf32>
    %149 = arith.mulf %147, %147 : vector<8x1xf32>
    %150 = arith.subf %148, %149 : vector<8x1xf32>
    %cst_43 = arith.constant 0.000000e+00 : f32
    %151 = vector.broadcast %cst_43 : f32 to vector<8x1xf32>
    %152 = arith.maximumf %150, %151 : vector<8x1xf32>
    %cst_44 = arith.constant 9.99999974E-6 : f32
    %153 = vector.broadcast %cst_44 : f32 to vector<8x1xf32>
    %154 = arith.addf %152, %153 : vector<8x1xf32>
    %155 = math.rsqrt %154 : vector<8x1xf32>
    %156 = arith.mulf %6, %155 : vector<8x1xf32>
    %157 = vector.broadcast %156 : vector<8x1xf32> to vector<8x256xf32>
    %158 = arith.mulf %139, %157 : vector<8x256xf32>
    %159 = arith.mulf %147, %156 : vector<8x1xf32>
    %160 = arith.subf %7, %159 : vector<8x1xf32>
    %161 = vector.broadcast %160 : vector<8x1xf32> to vector<8x256xf32>
    %162 = arith.addf %158, %161 : vector<8x256xf32>
    %163 = arith.addf %162, %0 : vector<8x256xf32>
    %c0_45 = arith.constant 0 : index
    %c0_46 = arith.constant 0 : index
    %164 = vector.load %arg4[%c0_45, %c0_46] : memref<8x256xf32, #tpu.memory_space<vmem>>, vector<8x256xf32>
    tpu.vector_store %arg4[%c0_45, %c0_46], %163 {strides = array<i32>} : memref<8x256xf32, #tpu.memory_space<vmem>>, vector<8x256xf32>,
    return
  }
}

</mosaic_0001>

<llo_original>
// kernel: tile.33
$region0: #{tile.33}
  #allocation0 [shape = 's32[1]{0}', space=sflag, size = 0x4, scoped, tag = 'scoped memory for tile.33']
  %s0 = inlined_call_operand.vmem [shape: f32[4], index: 0, kind: input, shape index: {}]
  %s1 = inlined_call_operand.vmem [shape: f32[2,4], index: 1, kind: output, shape index: {}]
  // Predicated region
  $region2: #{tile.33} parent=0 // pred_check
    _
  $region3: #{tile.33} parent=0 // pred_check_branch
    %3 = sbr.rel (0) target = $region5
  $region4: #{tile.33} parent=0 // pred_region
    _
  $region5: #{tile.33} parent=0 // pred_fallthru
    _
  %v4 = vld [vmem:[%s0] ss:$0 sm:$0xff]
  %5 = vst [vmem:[%s1] sm:$0x3] %v4

// kernel: tile.0
$region0: #{tile.0}
  %s0 = inlined_call_operand.vmem [shape: f32[2,4], index: 0, kind: input, shape index: {}]
  %s1 = inlined_call_operand.vmem [shape: f32[8,1], index: 1, kind: output, shape index: {}]
  $region1: #{tile.0} parent=0
    #allocation0 [shape = 'u8[4096]{0}', space=vmem, size = 0x1000, scoped, tag = 'scoped mem for input reshape']
    %s3 = sshll.u32 1, 2
    %s4 = ssub.s32 %s3, 1
    %v5 = vld [vmem:[%s0] sm:%s4]
    %6 = vst [vmem:[#allocation0] sm:%s4] %v5
    %v7 = vld [vmem:[#allocation0] sm:$0x3]
    %vm8 = vcmask 7168
    %9 = vst.msk [vmem:[%s1] ss:$4 sm:$0x3] %vm8, %v7
    %v10 = vld [vmem:[#allocation0] sm:$0x3]
    %11 = vrot.lane.b32.xlu0 %v10, 127
    %v12 = vpop.permute.xlu0 %11
    %vm13 = vcmask 7168
    %s14 = scalar_lea.vmem %s1, 1
    %15 = vst.msk [vmem:[%s14] ss:$4 sm:$0x3] %vm13, %v12
    %v16 = vld [vmem:[#allocation0] sm:$0x3]
    %17 = vrot.lane.b32.xlu0 %v16, 126
    %v18 = vpop.permute.xlu0 %17
    %vm19 = vcmask 7168
    %s20 = scalar_lea.vmem %s1, 2
    %21 = vst.msk [vmem:[%s20] ss:$4 sm:$0x3] %vm19, %v18
    %v22 = vld [vmem:[#allocation0] sm:$0x3]
    %23 = vrot.lane.b32.xlu0 %v22, 125
    %v24 = vpop.permute.xlu0 %23
    %vm25 = vcmask 7168
    %s26 = scalar_lea.vmem %s1, 3
    %27 = vst.msk [vmem:[%s26] ss:$4 sm:$0x3] %vm25, %v24

// kernel: resblock_transpose.1
$region0: #{resblock_transpose.1}
  #allocation0 [shape = 'u32[]', space=smem, size = 0x4, offset = 0x4, fixed_abs, tag = 'smem constant byte address 0x4 - core index']
  #allocation1 [shape = 'u32[144,128]{1,0:T(1,128)}', space=vmem, size = 0x12000, scoped, tag = 'internal scratch']
  %s0 = inlined_call_operand.vmem [shape: f32[8,256], index: 0, kind: input, shape index: {}]
  %s1 = inlined_call_operand.vmem [shape: bf16[8,72], index: 1, kind: input, shape index: {}]
  %s2 = inlined_call_operand.vmem [shape: bf16[8,72], index: 2, kind: input, shape index: {}]
  %s3 = inlined_call_operand.vmem [shape: f32[8,14], index: 3, kind: input, shape index: {}]
  %s4 = inlined_call_operand.vmem [shape: f32[8,256], index: 4, kind: output, shape index: {}]
  %s5 = sld [smem:[#allocation0]]
  $region26: #{resblock_transpose.1} parent=0
    _
  %s7 = ssub.s32 1, %s5
  %s8 = scalar_select 0, %s7, %s5
  // Predicated region
  $region2: #{resblock_transpose.1} parent=0 // pred_check
    _
  $region3: #{resblock_transpose.1} parent=0 // pred_check_branch
    %10 = sbr.rel (0) target = $region5
  $region4: #{resblock_transpose.1} parent=0 // pred_region
    _
  $region5: #{resblock_transpose.1} parent=0 // pred_fallthru
    _
  // Predicated region
  $region6: #{resblock_transpose.1} parent=0 // pred_check
    _
  $region7: #{resblock_transpose.1} parent=0 // pred_check_branch
    %12 = sbr.rel (0) target = $region9
  $region8: #{resblock_transpose.1} parent=0 // pred_region
    _
  $region9: #{resblock_transpose.1} parent=0 // pred_fallthru
    _
  // Predicated region
  $region10: #{resblock_transpose.1} parent=0 // pred_check
    _
  $region11: #{resblock_transpose.1} parent=0 // pred_check_branch
    %14 = sbr.rel (0) target = $region13
  $region12: #{resblock_transpose.1} parent=0 // pred_region
    _
  $region13: #{resblock_transpose.1} parent=0 // pred_fallthru
    _
  // Predicated region
  $region14: #{resblock_transpose.1} parent=0 // pred_check
    _
  $region15: #{resblock_transpose.1} parent=0 // pred_check_branch
    %16 = sbr.rel (0) target = $region17
  $region16: #{resblock_transpose.1} parent=0 // pred_region
    _
  $region17: #{resblock_transpose.1} parent=0 // pred_fallthru
    _
  %v20 = vld [vmem:[%s0] sm:$0xff]
  %v21 = vld [vmem:[%s0 + $0x8] sm:$0xff]
  %v22 = vld [vmem:[%s3] sm:$0xff]
  %v23 = vlaneseq
  %v24 = vand.u32 %v23, 127
  %v25 = vadd.s32 %v24, 128
  %vm26 = vcmp.lt.s32.totalorder %v24, 0
  %v27 = vsub.s32 0, %v24
  %v28 = vsel %vm26, %v27, %v24
  %v29 = vshrl.u32 %v28, 4
  %v30 = vand.u32 %v28, 15
  %v31 = vsub.s32 0, %v30
  %v32 = vsel %vm26, %v31, %v30
  %vm33 = vcmp.lt.s32.totalorder %v25, 0
  %v34 = vsub.s32 0, %v25
  %v35 = vsel %vm33, %v34, %v25
  %v36 = vshrl.u32 %v35, 4
  %v37 = vand.u32 %v35, 15
  %v38 = vsub.s32 0, %v37
  %v39 = vsel %vm33, %v38, %v37
  %vm40 = vcmp.ne.s32.totalorder %v32, 0
  %vm41 = vcmp.ne.s32.totalorder %v39, 0
  %vm42 = vcmp.lt.s32.totalorder %v32, 0
  %vm43 = vcmp.lt.s32.totalorder %v39, 0
  %vm44 = vmand %vm42, %vm40
  %vm45 = vmand %vm43, %vm41
  %v46 = vadd.s32 %v32, 16
  %v47 = vadd.s32 %v39, 16
  %v48 = vsel %vm44, %v46, %v32
  %v49 = vsel %vm45, %v47, %v39
  %vm50 = vcmp.ne.s32.totalorder %v48, 0
  %vm51 = vcmp.ne.s32.totalorder %v49, 0
  %vm52 = vcmp.ne.s32.totalorder %v48, 15
  %vm53 = vcmp.ne.s32.totalorder %v49, 15
  %v54 = vadd.f32 %v20, %v21
  %55 = vadd.xlane.f32.xlu0 %v54
  %v56 = vpop.xlane.xlu0 %55
  %v57 = vmul.f32 %v20, %v20
  %v58 = vmul.f32 %v21, %v21
  %v59 = vadd.f32 %v57, %v58
  %60 = vadd.xlane.f32.xlu0 %v59
  %v61 = vpop.xlane.xlu0 %60
  %vm62 = vcmask 7168
  %v63 = vsel %vm62, %v56, %v61
  %65 = vrot.lane.b32.xlu0 %v22, 122
  %v66 = vpop.permute.xlu0 %65
  %vm67 = vcmask 64512
  %v68 = vsel %vm67, %v66, 0
  %70 = vmatprep.subr.mxu0 0.0
  %71 = vmatpush1.msra.mxu0 0.0
  %72 = vmatprep.subr.mxu0 0.0
  %73 = vmatpush1.msra.mxu0 0.0
  %74 = vmatprep.subr.mxu0 0.0
  %75 = vmatpush1.msra.mxu0 0.0
  %76 = vmatprep.subr.mxu0 0.0
  %77 = vmatpush1.msra.mxu0 0.0
  %78 = vmatprep.subr.mxu0 0.0
  %79 = vmatpush1.msra.mxu0 0.0
  %80 = vmatprep.subr.mxu0 0.0
  %81 = vmatpush1.msra.mxu0 0.0
  %82 = vmatprep.subr.mxu0 0.0
  %83 = vmatpush1.msra.mxu0 0.0
  %84 = vmatprep.subr.mxu0 0.0
  %85 = vmatpush1.msra.mxu0 0.0
  %86 = vmatprep.subr.mxu0 0.0
  %87 = vmatpush1.msra.mxu0 0.0
  %88 = vmatprep.subr.mxu0 0.0
  %89 = vmatpush1.msra.mxu0 0.0
  %90 = vmatprep.subr.mxu0 0.0
  %91 = vmatpush1.msra.mxu0 0.0
  %92 = vmatprep.subr.mxu0 0.0
  %93 = vmatpush1.msra.mxu0 0.0
  %94 = vmatprep.subr.mxu0 0.0
  %95 = vmatpush1.msra.mxu0 0.0
  %96 = vmatprep.subr.mxu0 0.0
  %97 = vmatpush1.msra.mxu0 0.0
  %98 = vmatprep.subr.mxu0 0.0
  %99 = vmatpush1.msra.mxu0 0.0
  %100 = vmatprep.subr.mxu0 0.0
  %101 = vmatpush1.msra.mxu0 %v63
  %102 = vmatprep.subr.mxu0 0.0
  %103 = vmatpush2.msra.mxu0 0.0
  %104 = vmatprep.subr.mxu0 0.0
  %105 = vmatpush2.msra.mxu0 0.0
  %106 = vmatprep.subr.mxu0 0.0
  %107 = vmatpush2.msra.mxu0 0.0
  %108 = vmatprep.subr.mxu0 0.0
  %109 = vmatpush2.msra.mxu0 0.0
  %110 = vmatprep.subr.mxu0 0.0
  %111 = vmatpush2.msra.mxu0 0.0
  %112 = vmatprep.subr.mxu0 0.0
  %113 = vmatpush2.msra.mxu0 0.0
  %114 = vmatprep.subr.mxu0 0.0
  %115 = vmatpush2.msra.mxu0 0.0
  %116 = vmatprep.subr.mxu0 0.0
  %117 = vmatpush2.msra.mxu0 0.0
  %118 = vmatprep.subr.mxu0 0.0
  %119 = vmatpush2.msra.mxu0 0.0
  %120 = vmatprep.subr.mxu0 0.0
  %121 = vmatpush2.msra.mxu0 0.0
  %122 = vmatprep.subr.mxu0 0.0
  %123 = vmatpush2.msra.mxu0 0.0
  %124 = vmatprep.subr.mxu0 0.0
  %125 = vmatpush2.msra.mxu0 0.0
  %126 = vmatprep.subr.mxu0 0.0
  %127 = vmatpush2.msra.mxu0 0.0
  %128 = vmatprep.subr.mxu0 0.0
  %129 = vmatpush2.msra.mxu0 0.0
  %130 = vmatprep.subr.mxu0 0.0
  %131 = vmatpush2.msra.mxu0 0.0
  %132 = vmatprep.subr.mxu0 0.0
  %133 = vmatpush2.msra.mxu0 0.0
  %134 = vmatprep.mubr.f32.mxu0 0.0
  %135 = vmatmul.mubr.f32.gmra.mxu0 %v68
  %v136 = vpop.f32.mrf.mxu0
  %v137 = vadd.f32 0.0, %v136
  %v138 = vpop.f32.mrf.mxu0
  %139 = vdwg.mxu0
  %v140 = vmul.f32 %v137, %v137
  %142 = vrot.lane.b32.xlu0 %v140, 1
  %v143 = vpop.permute.xlu0 %142
  %v145 = vsub.f32 %v137, %v143
  %v146 = vmax.f32 %v145, 0.0
  %v147 = vadd.f32 %v146, 1e-05
  %v148 = vrsqrt.pop %v147
  %150 = vrot.lane.b32.xlu0 %v148, 127
  %v151 = vpop.permute.xlu0 %150
  %v153 = vmul.f32 %v22, %v151
  %155 = vset.pattern.permute.xlu0 0
  %156 = vperm.xlu0 %155, %v153
  %v157 = vpop.permute.xlu0 %156
  %v159 = vmul.f32 %v20, %v157
  %v160 = vmul.f32 %v21, %v157
  %v161 = vmul.f32 %v137, %v153
  %163 = vrot.lane.b32.xlu0 %v161, 1
  %v164 = vpop.permute.xlu0 %163
  %v166 = vsub.f32 %v22, %v164
  %168 = vset.pattern.permute.xlu0 1
  %169 = vperm.xlu0 %168, %v166
  %v170 = vpop.permute.xlu0 %169
  %v172 = vadd.f32 %v159, %v170
  %v173 = vadd.f32 %v160, %v170
  %vm174 = vcmp.gt.f32.partialorder %v172, 0.0
  %vm175 = vcmp.gt.f32.partialorder %v173, 0.0
  %v176 = vmul.f32 %v172, 0.02
  %v177 = vmul.f32 %v173, 0.02
  %v178 = vsel %vm174, %v172, %v176
  %v179 = vsel %vm175, %v173, %v177
  %v180 = vld [vmem:[%s1] sm:$0xf]
  %v181 = vpack.c.bf16 %v178, %v178
  %v182 = vpack.c.bf16 %v179, %v179
  %185 = vrot.lane.b32.xlu0 %v181, 17
  %v186 = vpop.permute.xlu0 %185
  %187 = vrot.lane.b32.xlu0 %v182, 17
  %v188 = vpop.permute.xlu0 %187
  %vm189 = vcmask 138240
  %v190 = vsel %vm189, %v186, %v188
  %vm192 = vcmask 138240
  %v195 = vsel %vm192, 0, %v186
  %v198 = vsel %vm192, %v188, 0
  %vm200 = vmpackc.low %vm51, %vm50
  %v201 = vsel %vm200, 65537, 0
  %v202 = vlaneseq
  %v203 = vshrl.u32 %v202, 7
  %v204 = vsub.s32 0, %v203
  %v205 = vrot.slane %v201, %v204
  %v206 = vlaneseq
  %v207 = vshrl.u32 %v206, 7
  %v208 = vsub.s32 4, %v207
  %v209 = vrot.slane %v201, %v208
  %vm210 = vcmp.ne.s16.totalorder %v205, 0
  %vm211 = vcmp.ne.s16.totalorder %v209, 0
  %v212 = vsel %vm210, %v195, 0
  %v213 = vsel %vm211, %v190, 0
  %vm214 = vmpackc.low %vm53, %vm52
  %v215 = vsel %vm214, 65537, 0
  %v216 = vlaneseq
  %v217 = vshrl.u32 %v216, 7
  %v218 = vsub.s32 0, %v217
  %v219 = vrot.slane %v215, %v218
  %v220 = vlaneseq
  %v221 = vshrl.u32 %v220, 7
  %v222 = vsub.s32 4, %v221
  %v223 = vrot.slane %v215, %v222
  %224 = vrot.lane.b32.xlu0 %v219, 2
  %v225 = vpop.permute.xlu0 %224
  %226 = vrot.lane.b32.xlu0 %v223, 2
  %v227 = vpop.permute.xlu0 %226
  %vm228 = vcmask 15360
  %v229 = vsel %vm228, %v225, %v227
  %vm230 = vcmp.ne.s16.totalorder %v225, 0
  %vm231 = vcmp.ne.s16.totalorder %v229, 0
  %vm232 = vcmp.ne.s16.totalorder %v227, 0
  %v233 = vsel %vm230, %v195, 0
  %v234 = vsel %vm231, %v190, 0
  %v235 = vsel %vm232, %v198, 0
  %236 = vrot.lane.b32.xlu0 %v205, 16
  %v237 = vpop.permute.xlu0 %236
  %238 = vrot.lane.b32.xlu0 %v209, 16
  %v239 = vpop.permute.xlu0 %238
  %vm240 = vcmask 130048
  %v241 = vsel %vm240, %v237, %v239
  %vm242 = vcmp.ne.s16.totalorder %v237, 0
  %vm243 = vcmp.ne.s16.totalorder %v241, 0
  %vm244 = vcmp.ne.s16.totalorder %v239, 0
  %v245 = vsel %vm242, %v195, 0
  %v246 = vsel %vm243, %v190, 0
  %v247 = vsel %vm244, %v198, 0
  %248 = vrot.lane.b32.xlu0 %v219, 18
  %v249 = vpop.permute.xlu0 %248
  %250 = vrot.lane.b32.xlu0 %v223, 18
  %v251 = vpop.permute.xlu0 %250
  %vm252 = vcmask 146432
  %v253 = vsel %vm252, %v249, %v251
  %vm254 = vcmp.ne.s16.totalorder %v249, 0
  %vm255 = vcmp.ne.s16.totalorder %v253, 0
  %vm256 = vcmp.ne.s16.totalorder %v251, 0
  %v257 = vsel %vm254, %v195, 0
  %v258 = vsel %vm255, %v190, 0
  %v259 = vsel %vm256, %v198, 0
  %260 = vrot.lane.b32.xlu0 %v205, 32
  %v261 = vpop.permute.xlu0 %260
  %262 = vrot.lane.b32.xlu0 %v209, 32
  %v263 = vpop.permute.xlu0 %262
  %vm264 = vcmask 261120
  %v265 = vsel %vm264, %v261, %v263
  %vm266 = vcmp.ne.s16.totalorder %v261, 0
  %vm267 = vcmp.ne.s16.totalorder %v265, 0
  %vm268 = vcmp.ne.s16.totalorder %v263, 0
  %v269 = vsel %vm266, %v195, 0
  %v270 = vsel %vm267, %v190, 0
  %v271 = vsel %vm268, %v198, 0
  %272 = vrot.lane.b32.xlu0 %v219, 34
  %v273 = vpop.permute.xlu0 %272
  %274 = vrot.lane.b32.xlu0 %v223, 34
  %v275 = vpop.permute.xlu0 %274
  %vm276 = vcmask 277504
  %v277 = vsel %vm276, %v273, %v275
  %vm278 = vcmp.ne.s16.totalorder %v273, 0
  %vm279 = vcmp.ne.s16.totalorder %v277, 0
  %vm280 = vcmp.ne.s16.totalorder %v275, 0
  %v281 = vsel %vm278, %v195, 0
  %v282 = vsel %vm279, %v190, 0
  %v283 = vsel %vm280, %v198, 0
  %v286 = vrot.slane %v195, 4
  %v287 = vrot.slane %v190, 4
  %v288 = vrot.slane %v198, 4
  %289 = vrot.lane.b32.xlu0 %v286, 127
  %v290 = vpop.permute.xlu0 %289
  %291 = vrot.lane.b32.xlu0 %v287, 127
  %v292 = vpop.permute.xlu0 %291
  %293 = vrot.lane.b32.xlu0 %v288, 127
  %v294 = vpop.permute.xlu0 %293
  %vm295 = vcmask 1039360
  %v296 = vsel %vm295, %v290, %v292
  %v297 = vsel %vm295, %v292, %v294
  %301 = vrot.lane.b32.xlu0 %v233, 126
  %v302 = vpop.permute.xlu0 %301
  %303 = vrot.lane.b32.xlu0 %v234, 126
  %v304 = vpop.permute.xlu0 %303
  %305 = vrot.lane.b32.xlu0 %v235, 126
  %v306 = vpop.permute.xlu0 %305
  %vm307 = vcmask 1031168
  %v308 = vsel %vm307, %v302, %v304
  %v309 = vsel %vm307, %v304, %v306
  %v313 = vrot.slane %v245, 4
  %v314 = vrot.slane %v246, 4
  %v315 = vrot.slane %v247, 4
  %316 = vrot.lane.b32.xlu0 %v313, 112
  %v317 = vpop.permute.xlu0 %316
  %318 = vrot.lane.b32.xlu0 %v314, 112
  %v319 = vpop.permute.xlu0 %318
  %320 = vrot.lane.b32.xlu0 %v315, 112
  %v321 = vpop.permute.xlu0 %320
  %vm322 = vcmask 916480
  %v323 = vsel %vm322, %v317, %v319
  %v324 = vsel %vm322, %v319, %v321
  %325 = vrot.lane.b32.xlu0 %v195, 111
  %v326 = vpop.permute.xlu0 %325
  %327 = vrot.lane.b32.xlu0 %v190, 111
  %v328 = vpop.permute.xlu0 %327
  %329 = vrot.lane.b32.xlu0 %v198, 111
  %v330 = vpop.permute.xlu0 %329
  %vm331 = vcmask 908288
  %v332 = vsel %vm331, %v326, %v328
  %v333 = vsel %vm331, %v328, %v330
  %v337 = vrot.slane %v257, 4
  %v338 = vrot.slane %v258, 4
  %v339 = vrot.slane %v259, 4
  %340 = vrot.lane.b32.xlu0 %v337, 110
  %v341 = vpop.permute.xlu0 %340
  %342 = vrot.lane.b32.xlu0 %v338, 110
  %v343 = vpop.permute.xlu0 %342
  %344 = vrot.lane.b32.xlu0 %v339, 110
  %v345 = vpop.permute.xlu0 %344
  %vm346 = vcmask 900096
  %v347 = vsel %vm346, %v341, %v343
  %v348 = vsel %vm346, %v343, %v345
  %352 = vrot.lane.b32.xlu0 %v269, 96
  %v353 = vpop.permute.xlu0 %352
  %354 = vrot.lane.b32.xlu0 %v270, 96
  %v355 = vpop.permute.xlu0 %354
  %356 = vrot.lane.b32.xlu0 %v271, 96
  %v357 = vpop.permute.xlu0 %356
  %vm358 = vcmask 785408
  %v359 = vsel %vm358, %v353, %v355
  %v360 = vsel %vm358, %v355, %v357
  %361 = vrot.lane.b32.xlu0 %v286, 95
  %v362 = vpop.permute.xlu0 %361
  %363 = vrot.lane.b32.xlu0 %v287, 95
  %v364 = vpop.permute.xlu0 %363
  %365 = vrot.lane.b32.xlu0 %v288, 95
  %v366 = vpop.permute.xlu0 %365
  %vm367 = vcmask 777216
  %v368 = vsel %vm367, %v362, %v364
  %v369 = vsel %vm367, %v364, %v366
  %373 = vrot.lane.b32.xlu0 %v281, 94
  %v374 = vpop.permute.xlu0 %373
  %375 = vrot.lane.b32.xlu0 %v282, 94
  %v376 = vpop.permute.xlu0 %375
  %377 = vrot.lane.b32.xlu0 %v283, 94
  %v378 = vpop.permute.xlu0 %377
  %vm379 = vcmask 769024
  %v380 = vsel %vm379, %v374, %v376
  %v381 = vsel %vm379, %v376, %v378
  %vm382 = vcmask 1043456
  %v385 = vsel %vm382, %v212, %v296
  %v389 = vsel %vm382, %v213, %v297
  %v393 = vsel %vm382, %v308, %v323
  %v397 = vsel %vm382, %v309, %v324
  %v401 = vsel %vm382, %v332, %v347
  %v405 = vsel %vm382, %v333, %v348
  %v409 = vsel %vm382, %v359, %v368
  %v413 = vsel %vm382, %v360, %v369
  %vm415 = vcmask 588800
  %v417 = vsel %vm415, %v180, 0
  %v420 = vsel %vm382, %v380, 0
  %v423 = vsel %vm382, %v381, 0
  %425 = vmatprep.subr.bf16.mxu0 0
  %426 = vmatpush1.bf16.msra.mxu0 0
  %427 = vmatprep.subr.bf16.mxu0 0
  %428 = vmatpush1.bf16.msra.mxu0 0
  %429 = vmatprep.subr.bf16.mxu0 0
  %430 = vmatpush1.bf16.msra.mxu0 0
  %431 = vmatprep.subr.bf16.mxu0 %v423
  %432 = vmatpush1.bf16.msra.mxu0 %v420
  %433 = vmatprep.subr.bf16.mxu0 %v413
  %434 = vmatpush1.bf16.msra.mxu0 %v409
  %435 = vmatprep.subr.bf16.mxu0 %v405
  %436 = vmatpush1.bf16.msra.mxu0 %v401
  %437 = vmatprep.subr.bf16.mxu0 %v397
  %438 = vmatpush1.bf16.msra.mxu0 %v393
  %439 = vmatprep.subr.bf16.mxu0 %v389
  %440 = vmatpush1.bf16.msra.mxu0 %v385
  %441 = vmatprep.subr.bf16.mxu0 0
  %442 = vmatpush2.bf16.msra.mxu0 0
  %443 = vmatprep.subr.bf16.mxu0 0
  %444 = vmatpush2.bf16.msra.mxu0 0
  %445 = vmatprep.subr.bf16.mxu0 0
  %446 = vmatpush2.bf16.msra.mxu0 0
  %447 = vmatprep.subr.bf16.mxu0 0
  %448 = vmatpush2.bf16.msra.mxu0 0
  %449 = vmatprep.subr.bf16.mxu0 0
  %450 = vmatpush2.bf16.msra.mxu0 0
  %451 = vmatprep.subr.bf16.mxu0 0
  %452 = vmatpush2.bf16.msra.mxu0 0
  %453 = vmatprep.subr.bf16.mxu0 0
  %454 = vmatpush2.bf16.msra.mxu0 0
  %455 = vmatprep.subr.bf16.mxu0 0
  %456 = vmatpush2.bf16.msra.mxu0 0
  %457 = vmatprep.mubr.bf16.mxu0 0
  %458 = vmatmul.mubr.bf16.gmra.mxu0 %v417
  %v459 = vpop.f32.mrf.mxu0
  %v460 = vadd.f32 0.0, %v459
  %v461 = vpop.f32.mrf.mxu0
  %v462 = vadd.f32 0.0, %v461
  %v463 = vpop.f32.mrf.mxu0
  %v464 = vpop.f32.mrf.mxu0
  %465 = vdwg.mxu0
  %v466 = vadd.f32 %v460, %v462
  %467 = vadd.xlane.f32.xlu0 %v466
  %v468 = vpop.xlane.xlu0 %467
  %v469 = vmul.f32 %v460, %v460
  %v470 = vmul.f32 %v462, %v462
  %v471 = vadd.f32 %v469, %v470
  %472 = vadd.xlane.f32.xlu0 %v471
  %v473 = vpop.xlane.xlu0 %472
  %v474 = vsel %vm62, %v468, %v473
  %475 = vmatprep.subr.mxu0 0.0
  %476 = vmatpush1.msra.mxu0 0.0
  %477 = vmatprep.subr.mxu0 0.0
  %478 = vmatpush1.msra.mxu0 0.0
  %479 = vmatprep.subr.mxu0 0.0
  %480 = vmatpush1.msra.mxu0 0.0
  %481 = vmatprep.subr.mxu0 0.0
  %482 = vmatpush1.msra.mxu0 0.0
  %483 = vmatprep.subr.mxu0 0.0
  %484 = vmatpush1.msra.mxu0 0.0
  %485 = vmatprep.subr.mxu0 0.0
  %486 = vmatpush1.msra.mxu0 0.0
  %487 = vmatprep.subr.mxu0 0.0
  %488 = vmatpush1.msra.mxu0 0.0
  %489 = vmatprep.subr.mxu0 0.0
  %490 = vmatpush1.msra.mxu0 0.0
  %491 = vmatprep.subr.mxu0 0.0
  %492 = vmatpush1.msra.mxu0 0.0
  %493 = vmatprep.subr.mxu0 0.0
  %494 = vmatpush1.msra.mxu0 0.0
  %495 = vmatprep.subr.mxu0 0.0
  %496 = vmatpush1.msra.mxu0 0.0
  %497 = vmatprep.subr.mxu0 0.0
  %498 = vmatpush1.msra.mxu0 0.0
  %499 = vmatprep.subr.mxu0 0.0
  %500 = vmatpush1.msra.mxu0 0.0
  %501 = vmatprep.subr.mxu0 0.0
  %502 = vmatpush1.msra.mxu0 0.0
  %503 = vmatprep.subr.mxu0 0.0
  %504 = vmatpush1.msra.mxu0 0.0
  %505 = vmatprep.subr.mxu0 0.0
  %506 = vmatpush1.msra.mxu0 %v474
  %507 = vmatprep.subr.mxu0 0.0
  %508 = vmatpush2.msra.mxu0 0.0
  %509 = vmatprep.subr.mxu0 0.0
  %510 = vmatpush2.msra.mxu0 0.0
  %511 = vmatprep.subr.mxu0 0.0
  %512 = vmatpush2.msra.mxu0 0.0
  %513 = vmatprep.subr.mxu0 0.0
  %514 = vmatpush2.msra.mxu0 0.0
  %515 = vmatprep.subr.mxu0 0.0
  %516 = vmatpush2.msra.mxu0 0.0
  %517 = vmatprep.subr.mxu0 0.0
  %518 = vmatpush2.msra.mxu0 0.0
  %519 = vmatprep.subr.mxu0 0.0
  %520 = vmatpush2.msra.mxu0 0.0
  %521 = vmatprep.subr.mxu0 0.0
  %522 = vmatpush2.msra.mxu0 0.0
  %523 = vmatprep.subr.mxu0 0.0
  %524 = vmatpush2.msra.mxu0 0.0
  %525 = vmatprep.subr.mxu0 0.0
  %526 = vmatpush2.msra.mxu0 0.0
  %527 = vmatprep.subr.mxu0 0.0
  %528 = vmatpush2.msra.mxu0 0.0
  %529 = vmatprep.subr.mxu0 0.0
  %530 = vmatpush2.msra.mxu0 0.0
  %531 = vmatprep.subr.mxu0 0.0
  %532 = vmatpush2.msra.mxu0 0.0
  %533 = vmatprep.subr.mxu0 0.0
  %534 = vmatpush2.msra.mxu0 0.0
  %535 = vmatprep.subr.mxu0 0.0
  %536 = vmatpush2.msra.mxu0 0.0
  %537 = vmatprep.subr.mxu0 0.0
  %538 = vmatpush2.msra.mxu0 0.0
  %539 = vmatprep.mubr.f32.mxu0 0.0
  %540 = vmatmul.mubr.f32.gmra.mxu0 %v68
  %v541 = vpop.f32.mrf.mxu0
  %v542 = vadd.f32 0.0, %v541
  %v543 = vpop.f32.mrf.mxu0
  %544 = vdwg.mxu0
  %v545 = vmul.f32 %v542, %v542
  %547 = vrot.lane.b32.xlu0 %v545, 1
  %v548 = vpop.permute.xlu0 %547
  %v550 = vsub.f32 %v542, %v548
  %v551 = vmax.f32 %v550, 0.0
  %v552 = vadd.f32 %v551, 1e-05
  %v553 = vrsqrt.pop %v552
  %555 = vrot.lane.b32.xlu0 %v553, 1
  %v556 = vpop.permute.xlu0 %555
  %v558 = vmul.f32 %v22, %v556
  %560 = vset.pattern.permute.xlu0 2
  %561 = vperm.xlu0 %560, %v558
  %v562 = vpop.permute.xlu0 %561
  %v564 = vmul.f32 %v460, %v562
  %v565 = vmul.f32 %v462, %v562
  %566 = vrot.lane.b32.xlu0 %v558, 126
  %v567 = vpop.permute.xlu0 %566
  %v569 = vmul.f32 %v542, %v567
  %571 = vrot.lane.b32.xlu0 %v569, 3
  %v572 = vpop.permute.xlu0 %571
  %v574 = vsub.f32 %v22, %v572
  %576 = vset.pattern.permute.xlu0 3
  %577 = vperm.xlu0 %576, %v574
  %v578 = vpop.permute.xlu0 %577
  %v580 = vadd.f32 %v564, %v578
  %v581 = vadd.f32 %v565, %v578
  %vm582 = vcmp.gt.f32.partialorder %v580, 0.0
  %vm583 = vcmp.gt.f32.partialorder %v581, 0.0
  %v584 = vmul.f32 %v580, 0.02
  %v585 = vmul.f32 %v581, 0.02
  %v586 = vsel %vm582, %v580, %v584
  %v587 = vsel %vm583, %v581, %v585
  %v588 = vld [vmem:[%s2] sm:$0xf]
  %v589 = vpack.c.bf16 %v586, %v586
  %v590 = vpack.c.bf16 %v587, %v587
  %593 = vrot.lane.b32.xlu0 %v589, 17
  %v594 = vpop.permute.xlu0 %593
  %595 = vrot.lane.b32.xlu0 %v590, 17
  %v596 = vpop.permute.xlu0 %595
  %v597 = vsel %vm189, %v594, %v596
  %v600 = vsel %vm192, 0, %v594
  %v603 = vsel %vm192, %v596, 0
  %v605 = vsel %vm210, %v600, 0
  %v606 = vsel %vm211, %v597, 0
  %v607 = vsel %vm230, %v600, 0
  %v608 = vsel %vm231, %v597, 0
  %v609 = vsel %vm232, %v603, 0
  %v610 = vsel %vm242, %v600, 0
  %v611 = vsel %vm243, %v597, 0
  %v612 = vsel %vm244, %v603, 0
  %v613 = vsel %vm254, %v600, 0
  %v614 = vsel %vm255, %v597, 0
  %v615 = vsel %vm256, %v603, 0
  %v616 = vsel %vm266, %v600, 0
  %v617 = vsel %vm267, %v597, 0
  %v618 = vsel %vm268, %v603, 0
  %v619 = vsel %vm278, %v600, 0
  %v620 = vsel %vm279, %v597, 0
  %v621 = vsel %vm280, %v603, 0
  %v624 = vrot.slane %v600, 4
  %v625 = vrot.slane %v597, 4
  %v626 = vrot.slane %v603, 4
  %627 = vrot.lane.b32.xlu0 %v624, 127
  %v628 = vpop.permute.xlu0 %627
  %629 = vrot.lane.b32.xlu0 %v625, 127
  %v630 = vpop.permute.xlu0 %629
  %631 = vrot.lane.b32.xlu0 %v626, 127
  %v632 = vpop.permute.xlu0 %631
  %v633 = vsel %vm295, %v628, %v630
  %v634 = vsel %vm295, %v630, %v632
  %638 = vrot.lane.b32.xlu0 %v607, 126
  %v639 = vpop.permute.xlu0 %638
  %640 = vrot.lane.b32.xlu0 %v608, 126
  %v641 = vpop.permute.xlu0 %640
  %642 = vrot.lane.b32.xlu0 %v609, 126
  %v643 = vpop.permute.xlu0 %642
  %v644 = vsel %vm307, %v639, %v641
  %v645 = vsel %vm307, %v641, %v643
  %v649 = vrot.slane %v610, 4
  %v650 = vrot.slane %v611, 4
  %v651 = vrot.slane %v612, 4
  %652 = vrot.lane.b32.xlu0 %v649, 112
  %v653 = vpop.permute.xlu0 %652
  %654 = vrot.lane.b32.xlu0 %v650, 112
  %v655 = vpop.permute.xlu0 %654
  %656 = vrot.lane.b32.xlu0 %v651, 112
  %v657 = vpop.permute.xlu0 %656
  %v658 = vsel %vm322, %v653, %v655
  %v659 = vsel %vm322, %v655, %v657
  %660 = vrot.lane.b32.xlu0 %v600, 111
  %v661 = vpop.permute.xlu0 %660
  %662 = vrot.lane.b32.xlu0 %v597, 111
  %v663 = vpop.permute.xlu0 %662
  %664 = vrot.lane.b32.xlu0 %v603, 111
  %v665 = vpop.permute.xlu0 %664
  %v666 = vsel %vm331, %v661, %v663
  %v667 = vsel %vm331, %v663, %v665
  %v671 = vrot.slane %v613, 4
  %v672 = vrot.slane %v614, 4
  %v673 = vrot.slane %v615, 4
  %674 = vrot.lane.b32.xlu0 %v671, 110
  %v675 = vpop.permute.xlu0 %674
  %676 = vrot.lane.b32.xlu0 %v672, 110
  %v677 = vpop.permute.xlu0 %676
  %678 = vrot.lane.b32.xlu0 %v673, 110
  %v679 = vpop.permute.xlu0 %678
  %v680 = vsel %vm346, %v675, %v677
  %v681 = vsel %vm346, %v677, %v679
  %685 = vrot.lane.b32.xlu0 %v616, 96
  %v686 = vpop.permute.xlu0 %685
  %687 = vrot.lane.b32.xlu0 %v617, 96
  %v688 = vpop.permute.xlu0 %687
  %689 = vrot.lane.b32.xlu0 %v618, 96
  %v690 = vpop.permute.xlu0 %689
  %v691 = vsel %vm358, %v686, %v688
  %v692 = vsel %vm358, %v688, %v690
  %693 = vrot.lane.b32.xlu0 %v624, 95
  %v694 = vpop.permute.xlu0 %693
  %695 = vrot.lane.b32.xlu0 %v625, 95
  %v696 = vpop.permute.xlu0 %695
  %697 = vrot.lane.b32.xlu0 %v626, 95
  %v698 = vpop.permute.xlu0 %697
  %v699 = vsel %vm367, %v694, %v696
  %v700 = vsel %vm367, %v696, %v698
  %704 = vrot.lane.b32.xlu0 %v619, 94
  %v705 = vpop.permute.xlu0 %704
  %706 = vrot.lane.b32.xlu0 %v620, 94
  %v707 = vpop.permute.xlu0 %706
  %708 = vrot.lane.b32.xlu0 %v621, 94
  %v709 = vpop.permute.xlu0 %708
  %v710 = vsel %vm379, %v705, %v707
  %v711 = vsel %vm379, %v707, %v709
  %v714 = vsel %vm382, %v605, %v633
  %v718 = vsel %vm382, %v606, %v634
  %v722 = vsel %vm382, %v644, %v658
  %v726 = vsel %vm382, %v645, %v659
  %v730 = vsel %vm382, %v666, %v680
  %v734 = vsel %vm382, %v667, %v681
  %v738 = vsel %vm382, %v691, %v699
  %v742 = vsel %vm382, %v692, %v700
  %v745 = vsel %vm415, %v588, 0
  %v748 = vsel %vm382, %v710, 0
  %v751 = vsel %vm382, %v711, 0
  %753 = vmatprep.subr.bf16.mxu0 0
  %754 = vmatpush1.bf16.msra.mxu0 0
  %755 = vmatprep.subr.bf16.mxu0 0
  %756 = vmatpush1.bf16.msra.mxu0 0
  %757 = vmatprep.subr.bf16.mxu0 0
  %758 = vmatpush1.bf16.msra.mxu0 0
  %759 = vmatprep.subr.bf16.mxu0 %v751
  %760 = vmatpush1.bf16.msra.mxu0 %v748
  %761 = vmatprep.subr.bf16.mxu0 %v742
  %762 = vmatpush1.bf16.msra.mxu0 %v738
  %763 = vmatprep.subr.bf16.mxu0 %v734
  %764 = vmatpush1.bf16.msra.mxu0 %v730
  %765 = vmatprep.subr.bf16.mxu0 %v726
  %766 = vmatpush1.bf16.msra.mxu0 %v722
  %767 = vmatprep.subr.bf16.mxu0 %v718
  %768 = vmatpush1.bf16.msra.mxu0 %v714
  %769 = vmatprep.subr.bf16.mxu0 0
  %770 = vmatpush2.bf16.msra.mxu0 0
  %771 = vmatprep.subr.bf16.mxu0 0
  %772 = vmatpush2.bf16.msra.mxu0 0
  %773 = vmatprep.subr.bf16.mxu0 0
  %774 = vmatpush2.bf16.msra.mxu0 0
  %775 = vmatprep.subr.bf16.mxu0 0
  %776 = vmatpush2.bf16.msra.mxu0 0
  %777 = vmatprep.subr.bf16.mxu0 0
  %778 = vmatpush2.bf16.msra.mxu0 0
  %779 = vmatprep.subr.bf16.mxu0 0
  %780 = vmatpush2.bf16.msra.mxu0 0
  %781 = vmatprep.subr.bf16.mxu0 0
  %782 = vmatpush2.bf16.msra.mxu0 0
  %783 = vmatprep.subr.bf16.mxu0 0
  %784 = vmatpush2.bf16.msra.mxu0 0
  %785 = vmatprep.mubr.bf16.mxu0 0
  %786 = vmatmul.mubr.bf16.gmra.mxu0 %v745
  %v787 = vpop.f32.mrf.mxu0
  %v788 = vadd.f32 0.0, %v787
  %v789 = vpop.f32.mrf.mxu0
  %v790 = vadd.f32 0.0, %v789
  %v791 = vpop.f32.mrf.mxu0
  %v792 = vpop.f32.mrf.mxu0
  %793 = vdwg.mxu0
  %v794 = vadd.f32 %v788, %v790
  %795 = vadd.xlane.f32.xlu0 %v794
  %v796 = vpop.xlane.xlu0 %795
  %v797 = vmul.f32 %v788, %v788
  %v798 = vmul.f32 %v790, %v790
  %v799 = vadd.f32 %v797, %v798
  %800 = vadd.xlane.f32.xlu0 %v799
  %v801 = vpop.xlane.xlu0 %800
  %v802 = vsel %vm62, %v796, %v801
  %803 = vmatprep.subr.mxu0 0.0
  %804 = vmatpush1.msra.mxu0 0.0
  %805 = vmatprep.subr.mxu0 0.0
  %806 = vmatpush1.msra.mxu0 0.0
  %807 = vmatprep.subr.mxu0 0.0
  %808 = vmatpush1.msra.mxu0 0.0
  %809 = vmatprep.subr.mxu0 0.0
  %810 = vmatpush1.msra.mxu0 0.0
  %811 = vmatprep.subr.mxu0 0.0
  %812 = vmatpush1.msra.mxu0 0.0
  %813 = vmatprep.subr.mxu0 0.0
  %814 = vmatpush1.msra.mxu0 0.0
  %815 = vmatprep.subr.mxu0 0.0
  %816 = vmatpush1.msra.mxu0 0.0
  %817 = vmatprep.subr.mxu0 0.0
  %818 = vmatpush1.msra.mxu0 0.0
  %819 = vmatprep.subr.mxu0 0.0
  %820 = vmatpush1.msra.mxu0 0.0
  %821 = vmatprep.subr.mxu0 0.0
  %822 = vmatpush1.msra.mxu0 0.0
  %823 = vmatprep.subr.mxu0 0.0
  %824 = vmatpush1.msra.mxu0 0.0
  %825 = vmatprep.subr.mxu0 0.0
  %826 = vmatpush1.msra.mxu0 0.0
  %827 = vmatprep.subr.mxu0 0.0
  %828 = vmatpush1.msra.mxu0 0.0
  %829 = vmatprep.subr.mxu0 0.0
  %830 = vmatpush1.msra.mxu0 0.0
  %831 = vmatprep.subr.mxu0 0.0
  %832 = vmatpush1.msra.mxu0 0.0
  %833 = vmatprep.subr.mxu0 0.0
  %834 = vmatpush1.msra.mxu0 %v802
  %835 = vmatprep.subr.mxu0 0.0
  %836 = vmatpush2.msra.mxu0 0.0
  %837 = vmatprep.subr.mxu0 0.0
  %838 = vmatpush2.msra.mxu0 0.0
  %839 = vmatprep.subr.mxu0 0.0
  %840 = vmatpush2.msra.mxu0 0.0
  %841 = vmatprep.subr.mxu0 0.0
  %842 = vmatpush2.msra.mxu0 0.0
  %843 = vmatprep.subr.mxu0 0.0
  %844 = vmatpush2.msra.mxu0 0.0
  %845 = vmatprep.subr.mxu0 0.0
  %846 = vmatpush2.msra.mxu0 0.0
  %847 = vmatprep.subr.mxu0 0.0
  %848 = vmatpush2.msra.mxu0 0.0
  %849 = vmatprep.subr.mxu0 0.0
  %850 = vmatpush2.msra.mxu0 0.0
  %851 = vmatprep.subr.mxu0 0.0
  %852 = vmatpush2.msra.mxu0 0.0
  %853 = vmatprep.subr.mxu0 0.0
  %854 = vmatpush2.msra.mxu0 0.0
  %855 = vmatprep.subr.mxu0 0.0
  %856 = vmatpush2.msra.mxu0 0.0
  %857 = vmatprep.subr.mxu0 0.0
  %858 = vmatpush2.msra.mxu0 0.0
  %859 = vmatprep.subr.mxu0 0.0
  %860 = vmatpush2.msra.mxu0 0.0
  %861 = vmatprep.subr.mxu0 0.0
  %862 = vmatpush2.msra.mxu0 0.0
  %863 = vmatprep.subr.mxu0 0.0
  %864 = vmatpush2.msra.mxu0 0.0
  %865 = vmatprep.subr.mxu0 0.0
  %866 = vmatpush2.msra.mxu0 0.0
  %867 = vmatprep.mubr.f32.mxu0 0.0
  %868 = vmatmul.mubr.f32.gmra.mxu0 %v68
  %v869 = vpop.f32.mrf.mxu0
  %v870 = vadd.f32 0.0, %v869
  %v871 = vpop.f32.mrf.mxu0
  %872 = vdwg.mxu0
  %v873 = vmul.f32 %v870, %v870
  %875 = vrot.lane.b32.xlu0 %v873, 1
  %v876 = vpop.permute.xlu0 %875
  %v878 = vsub.f32 %v870, %v876
  %v879 = vmax.f32 %v878, 0.0
  %v880 = vadd.f32 %v879, 1e-05
  %v881 = vrsqrt.pop %v880
  %883 = vrot.lane.b32.xlu0 %v881, 3
  %v884 = vpop.permute.xlu0 %883
  %v886 = vmul.f32 %v22, %v884
  %888 = vset.pattern.permute.xlu0 4
  %889 = vperm.xlu0 %888, %v886
  %v890 = vpop.permute.xlu0 %889
  %v892 = vmul.f32 %v788, %v890
  %v893 = vmul.f32 %v790, %v890
  %894 = vrot.lane.b32.xlu0 %v886, 124
  %v895 = vpop.permute.xlu0 %894
  %v897 = vmul.f32 %v870, %v895
  %899 = vrot.lane.b32.xlu0 %v897, 5
  %v900 = vpop.permute.xlu0 %899
  %v902 = vsub.f32 %v22, %v900
  %904 = vset.pattern.permute.xlu0 5
  %905 = vperm.xlu0 %904, %v902
  %v906 = vpop.permute.xlu0 %905
  %v908 = vadd.f32 %v892, %v906
  %v909 = vadd.f32 %v893, %v906
  %v910 = vadd.f32 %v908, %v20
  %v911 = vadd.f32 %v909, %v21
  %912 = vst [vmem:[%s4] sm:$0xff] %v910
  %913 = vst [vmem:[%s4 + $0x8] sm:$0xff] %v911
  // Predicated region
  $region18: #{resblock_transpose.1} parent=0 // pred_check
    _
  $region19: #{resblock_transpose.1} parent=0 // pred_check_branch
    %915 = sbr.rel (0) target = $region21
  $region20: #{resblock_transpose.1} parent=0 // pred_region
    _
  $region21: #{resblock_transpose.1} parent=0 // pred_fallthru
    _
  // Predicated region
  $region22: #{resblock_transpose.1} parent=0 // pred_check
    _
  $region23: #{resblock_transpose.1} parent=0 // pred_check_branch
    %917 = sbr.rel (0) target = $region25
  $region24: #{resblock_transpose.1} parent=0 // pred_region
    _
  $region25: #{resblock_transpose.1} parent=0 // pred_fallthru
    _

</llo_original>
